<compile_context>
chip_gen: v5e
topology: v5e:2x2
jax: 0.10.0
libtpu: 0.0.40
codegen_flags: <defaults>
</compile_context>

<pallas_src>
import functools
import math

import jax
import jax.numpy as jnp
from jax.experimental import pallas as pl
from jax.experimental.pallas import tpu as pltpu


_VMEM_LIMIT = 64 * 1024 * 1024   # scoped-VMEM cap (not an allocation)


# ----------------------------- in-kernel helpers -----------------------------

def _layernorm(x, gamma, beta, eps=1e-5):
    mu = jnp.mean(x, axis=-1, keepdims=True)
    var = jnp.mean((x - mu) ** 2, axis=-1, keepdims=True)
    return (x - mu) * jax.lax.rsqrt(var + eps) * gamma + beta


_GELU_C = math.sqrt(2.0 / math.pi)


def _gelu_tanh(x):
    # tanh-approx GELU: tanh lowers to the (otherwise idle) EUP slot instead of
    # ~10 VALU ops of an erf polynomial; |delta| vs exact erf-GELU <~ 1e-3.
    return 0.5 * x * (1.0 + jnp.tanh(_GELU_C * (x + 0.044715 * x * x * x)))


# --------------------------------- kernels -----------------------------------

def patch_embed_kernel(tok_ref, w_ref, b_ref, pos_ref, cls_ref, o_ref):
    # tok_ref: (1, Np, Pd) f32   w_ref: (Pd, D) bf16   b/cls_ref: (1, D) f32
    # pos_ref: (Np, D) f32       o_ref: (1, Np+1, D) f32
    y = jnp.dot(tok_ref[0].astype(jnp.bfloat16), w_ref[...],
                preferred_element_type=jnp.float32)
    y = y + b_ref[...] + pos_ref[...]
    # fused cls-token prepend — two direct stores, no concatenate temporary
    o_ref[0, :1, :] = cls_ref[...]
    o_ref[0, 1:, :] = y


def transformer_stack_kernel(x_ref,
                             ln1g_ref, ln1b_ref, wqkv_ref, wo_ref, bo_ref,
                             ln2g_ref, ln2b_ref, w1_ref, b1_ref, w2_ref, b2_ref,
                             lnfg_ref, lnfb_ref,
                             o_ref, carry_ref, *, heads, dim_head):
    layer = pl.program_id(1)
    n_layers = pl.num_programs(1)

    # layer 0: load this batch's tokens into the VMEM-resident carry
    @pl.when(layer == 0)
    def _():
        carry_ref[...] = x_ref[0]

    x = carry_ref[...]                                   # (N, D) f32
    N = x.shape[0]
    dh = dim_head
    inner = heads * dh

    # ---- PreNorm(Attention) + residual ----
    xn = _layernorm(x, ln1g_ref[0], ln1b_ref[0]).astype(jnp.bfloat16)
    # wqkv_ref: (1, 3, D, inner) bf16; W_q is pre-scaled by dim_head**-0.5.
    q = jnp.dot(xn, wqkv_ref[0, 0], preferred_element_type=jnp.float32)
    k = jnp.dot(xn, wqkv_ref[0, 1], preferred_element_type=jnp.float32)
    v = jnp.dot(xn, wqkv_ref[0, 2], preferred_element_type=jnp.float32)

    # 'n (h d) -> h n d' with one reshape + one transpose per tensor
    def split_heads(t):
        return jnp.swapaxes(t.reshape(N, heads, dh), 0, 1).astype(jnp.bfloat16)

    qh, kh, vh = split_heads(q), split_heads(k), split_heads(v)

    sim = jnp.einsum("hid,hjd->hij", qh, kh,
                     preferred_element_type=jnp.float32)          # (h, N, N) f32
    sim = sim - jnp.max(sim, axis=-1, keepdims=True)
    p = jnp.exp(sim)
    attn = p * pl.reciprocal(jnp.sum(p, axis=-1, keepdims=True), approx=True)
    oh = jnp.einsum("hij,hjd->hid", attn.astype(jnp.bfloat16), vh,
                    preferred_element_type=jnp.float32)           # (h, N, dh) f32

    # 'h n d -> n (h d)'
    o_cat = jnp.swapaxes(oh, 0, 1).reshape(N, inner).astype(jnp.bfloat16)
    x = x + jnp.dot(o_cat, wo_ref[0], preferred_element_type=jnp.float32) + bo_ref[0]

    # ---- PreNorm(FeedForward) + residual ----
    xn2 = _layernorm(x, ln2g_ref[0], ln2b_ref[0]).astype(jnp.bfloat16)
    h1 = jnp.dot(xn2, w1_ref[0], preferred_element_type=jnp.float32) + b1_ref[0]
    h1 = _gelu_tanh(h1).astype(jnp.bfloat16)
    out = x + jnp.dot(h1, w2_ref[0], preferred_element_type=jnp.float32) + b2_ref[0]

    carry_ref[...] = out

    # last layer: fused final LayerNorm, single HBM writeback per batch block
    @pl.when(layer == n_layers - 1)
    def _():
        o_ref[0] = _layernorm(out, lnfg_ref[...], lnfb_ref[...])


# -------------------------------- wrappers ------------------------------------

def patch_embed(tokens, w_bf16, b, pos, cls2d):
    B, Np, Pd = tokens.shape
    D = w_bf16.shape[1]
    return pl.pallas_call(
        patch_embed_kernel,
        out_shape=jax.ShapeDtypeStruct((B, Np + 1, D), jnp.float32),
        grid=(B,),
        in_specs=[
            pl.BlockSpec((1, Np, Pd), lambda i: (i, 0, 0)),
            pl.BlockSpec((Pd, D), lambda i: (0, 0)),
            pl.BlockSpec((1, D), lambda i: (0, 0)),
            pl.BlockSpec((Np, D), lambda i: (0, 0)),
            pl.BlockSpec((1, D), lambda i: (0, 0)),
        ],
        out_specs=pl.BlockSpec((1, Np + 1, D), lambda i: (i, 0, 0)),
        compiler_params=pltpu.CompilerParams(
            dimension_semantics=("parallel",),
            vmem_limit_bytes=_VMEM_LIMIT),
    )(tokens, w_bf16, b, pos, cls2d)


def transformer_stack(x, st, lnf_g, lnf_b, *, heads, dim_head):
    B, N, D = x.shape
    depth = st["w_qkv"].shape[0]
    inner = heads * dim_head
    hidden = st["w1"].shape[-1]

    kern = functools.partial(transformer_stack_kernel, heads=heads, dim_head=dim_head)

    p2 = lambda b, l: (l, 0, 0)       # (depth, 1, X) small params
    p3 = lambda b, l: (l, 0, 0)       # (depth, A, B) weights
    p4 = lambda b, l: (l, 0, 0, 0)    # (depth, 3, D, inner)

    flops = int(B * depth * (2 * N * D * 3 * inner        # qkv projection
                             + 4 * heads * N * N * dim_head   # qk^T and attn@v
                             + 2 * N * inner * D               # out projection
                             + 4 * N * D * hidden))            # two MLP matmuls
    transc = int(B * depth * (heads * N * N + N * hidden))
    bytes_acc = int(4 * 2 * B * N * D
                    + 2 * B * depth * (3 * D * inner + inner * D + 2 * D * hidden)
                    + 4 * depth * (6 * D + hidden))

    return pl.pallas_call(
        kern,
        out_shape=jax.ShapeDtypeStruct((B, N, D), jnp.float32),
        grid=(B, depth),
        in_specs=[
            pl.BlockSpec((1, N, D), lambda b, l: (b, 0, 0)),        # tokens
            pl.BlockSpec((1, 1, D), p2),                            # ln1 gamma
            pl.BlockSpec((1, 1, D), p2),                            # ln1 beta
            pl.BlockSpec((1, 3, D, inner), p4),                     # W_qkv (q pre-scaled)
            pl.BlockSpec((1, inner, D), p3),                        # W_out
            pl.BlockSpec((1, 1, D), p2),                            # b_out
            pl.BlockSpec((1, 1, D), p2),                            # ln2 gamma
            pl.BlockSpec((1, 1, D), p2),                            # ln2 beta
            pl.BlockSpec((1, D, hidden), p3),                       # W_ff1
            pl.BlockSpec((1, 1, hidden), p2),                       # b_ff1
            pl.BlockSpec((1, hidden, D), p3),                       # W_ff2
            pl.BlockSpec((1, 1, D), p2),                            # b_ff2
            pl.BlockSpec((1, D), lambda b, l: (0, 0)),              # final LN gamma
            pl.BlockSpec((1, D), lambda b, l: (0, 0)),              # final LN beta
        ],
        out_specs=pl.BlockSpec((1, N, D), lambda b, l: (b, 0, 0)),
        scratch_shapes=[pltpu.VMEM((N, D), jnp.float32)],           # activation carry
        compiler_params=pltpu.CompilerParams(
            dimension_semantics=("parallel", "arbitrary"),
            vmem_limit_bytes=_VMEM_LIMIT),
        cost_estimate=pl.CostEstimate(flops=flops, transcendentals=transc,
                                      bytes_accessed=bytes_acc),
    )(x, st["ln1_g"], st["ln1_b"], st["w_qkv"], st["w_out"], st["b_out"],
      st["ln2_g"], st["ln2_b"], st["w1"], st["b1"], st["w2"], st["b2"],
      lnf_g, lnf_b)


# ----------------------------- model (JAX glue) --------------------------------

def patchify(x, patch_size):
    # 'b c (h p1) (w p2) -> b (h w) (p1 p2 c)'  — pure layout, done in plain JAX
    B, C, H, W = x.shape
    p = patch_size
    hh, ww = H // p, W // p
    t = x.reshape(B, C, hh, p, ww, p)
    t = jnp.transpose(t, (0, 2, 4, 3, 5, 1))
    return t.reshape(B, hh * ww, p * p * C)


def init_params(key, *, dim, image_size, patch_size, channels, depth, heads,
                dim_head, ff_mult):
    num_patches = (image_size // patch_size) ** 2
    patch_dim = channels * patch_size ** 2
    inner = heads * dim_head
    hidden = int(dim * ff_mult)
    keys = jax.random.split(key, 4 + depth)
    params = {
        "cls": jax.random.normal(keys[0], (dim,), jnp.float32),
        "patch_w": 0.02 * jax.random.normal(keys[1], (patch_dim, dim), jnp.float32),
        "patch_b": 0.02 * jax.random.normal(keys[2], (dim,), jnp.float32),
        "pos_emb": jax.random.normal(keys[3], (num_patches, dim), jnp.float32),
        "lnf_g": jnp.ones((dim,), jnp.float32),
        "lnf_b": jnp.zeros((dim,), jnp.float32),
        "layers": [],
    }
    for l in range(depth):
        lk = jax.random.split(keys[4 + l], 6)
        params["layers"].append({
            "ln1_g": jnp.ones((dim,), jnp.float32),
            "ln1_b": jnp.zeros((dim,), jnp.float32),
            # (3, dim, inner): the [W_q, W_k, W_v] chunks of nn.Linear(dim, 3*inner, bias=False)
            "w_qkv3": 0.02 * jax.random.normal(lk[0], (3, dim, inner), jnp.float32),
            "w_out": 0.02 * jax.random.normal(lk[1], (inner, dim), jnp.float32),
            "b_out": 0.02 * jax.random.normal(lk[2], (dim,), jnp.float32),
            "ln2_g": jnp.ones((dim,), jnp.float32),
            "ln2_b": jnp.zeros((dim,), jnp.float32),
            "w1": 0.02 * jax.random.normal(lk[3], (dim, hidden), jnp.float32),
            "b1": 0.02 * jax.random.normal(lk[4], (hidden,), jnp.float32),
            "w2": 0.02 * jax.random.normal(lk[5], (hidden, dim), jnp.float32),
            "b2": jnp.zeros((dim,), jnp.float32),
        })
    return params


def prepare_stack(layers, *, dim_head):
    """Stack per-layer weights on a leading (depth,) axis for the fused kernel.

    Weights go to bf16 (MXU-native), small params stay f32 as (depth, 1, X).
    The attention scale is folded into the W_q slice.
    """
    scale = dim_head ** -0.5

    def stack_w(name):
        return jnp.stack([lp[name] for lp in layers]).astype(jnp.bfloat16)

    def stack_p(name):
        return jnp.stack([lp[name][None, :] for lp in layers]).astype(jnp.float32)

    w_qkv = jnp.stack([lp["w_qkv3"] for lp in layers])          # (depth, 3, D, inner)
    w_qkv = w_qkv.at[:, 0].multiply(scale).astype(jnp.bfloat16)

    return dict(
        ln1_g=stack_p("ln1_g"), ln1_b=stack_p("ln1_b"),
        w_qkv=w_qkv,
        w_out=stack_w("w_out"), b_out=stack_p("b_out"),
        ln2_g=stack_p("ln2_g"), ln2_b=stack_p("ln2_b"),
        w1=stack_w("w1"), b1=stack_p("b1"),
        w2=stack_w("w2"), b2=stack_p("b2"),
    )


def vision_transformer_forward(x, params, *, patch_size, heads, dim_head):
    tokens = patchify(x, patch_size)
    D = params["cls"].shape[0]
    # to_tokens Linear + pos_emb add + cls prepend, fused in one kernel
    t = patch_embed(tokens,
                    params["patch_w"].astype(jnp.bfloat16),
                    params["patch_b"].reshape(1, D),
                    params["pos_emb"],
                    params["cls"].reshape(1, D))
    # whole transformer stack (all layers + final LayerNorm) in one pallas_call
    stacked = prepare_stack(params["layers"], dim_head=dim_head)
    t = transformer_stack(t, stacked,
                          params["lnf_g"].reshape(1, D),
                          params["lnf_b"].reshape(1, D),
                          heads=heads, dim_head=dim_head)
    return t, None   # Transformer.forward returns (norm_out(x), None)


# ----------------------------- plain-JAX reference -----------------------------

def _ln_ref(x, g, b, eps=1e-5):
    mu = jnp.mean(x, axis=-1, keepdims=True)
    var = jnp.mean((x - mu) ** 2, axis=-1, keepdims=True)
    return (x - mu) / jnp.sqrt(var + eps) * g + b


def vit_reference(x, params, *, patch_size, heads, dim_head):
    tokens = patchify(x, patch_size)
    t = tokens @ params["patch_w"] + params["patch_b"] + params["pos_emb"]
    B = t.shape[0]
    D = params["cls"].shape[0]
    cls = jnp.broadcast_to(params["cls"].reshape(1, 1, D), (B, 1, D))
    t = jnp.concatenate([cls, t], axis=1)
    N = t.shape[1]
    inner = heads * dim_head
    scale = dim_head ** -0.5
    for lp in params["layers"]:
        xn = _ln_ref(t, lp["ln1_g"], lp["ln1_b"])
        q = xn @ lp["w_qkv3"][0]
        k = xn @ lp["w_qkv3"][1]
        v = xn @ lp["w_qkv3"][2]
        sh = lambda a: a.reshape(B, N, heads, dim_head).transpose(0, 2, 1, 3)
        q, k, v = sh(q), sh(k), sh(v)
        sim = jnp.einsum("bhid,bhjd->bhij", q, k) * scale
        attn = jax.nn.softmax(sim, axis=-1)
        o = jnp.einsum("bhij,bhjd->bhid", attn, v).transpose(0, 2, 1, 3).reshape(B, N, inner)
        t = t + o @ lp["w_out"] + lp["b_out"]
        xn2 = _ln_ref(t, lp["ln2_g"], lp["ln2_b"])
        h1 = jax.nn.gelu(xn2 @ lp["w1"] + lp["b1"], approximate=False)
        t = t + h1 @ lp["w2"] + lp["b2"]
    return _ln_ref(t, params["lnf_g"], params["lnf_b"])


# ----------------------------------- main --------------------------------------

if __name__ == "__main__":
    # Small config: dim=32, image 16x16, patch 4, channels 4 -> 16 patches (+1 cls)
    cfg = dict(dim=32, image_size=16, patch_size=4, channels=4,
               depth=2, heads=4, dim_head=8, ff_mult=4)

    key = jax.random.PRNGKey(0)
    pkey, xkey = jax.random.split(key)
    params = init_params(pkey, **cfg)

    x = jax.random.normal(
        xkey, (2, cfg["channels"], cfg["image_size"], cfg["image_size"]), jnp.float32)

    out, attn = vision_transformer_forward(
        x, params, patch_size=cfg["patch_size"], heads=cfg["heads"],
        dim_head=cfg["dim_head"])
    out = jax.block_until_ready(out)

    ref = vit_reference(
        x, params, patch_size=cfg["patch_size"], heads=cfg["heads"],
        dim_head=cfg["dim_head"])
    ref = jax.block_until_ready(ref)

    assert out.shape == (2, (cfg["image_size"] // cfg["patch_size"]) ** 2 + 1, cfg["dim"])
    assert jnp.all(jnp.isfinite(out))
    max_err = float(jnp.max(jnp.abs(out - ref)))
    assert max_err < 2e-2, f"mismatch vs reference: {max_err}"

    print("KERNEL_OK")
</pallas_src>

<mosaic_0001>
module attributes {stable_mosaic.version = 11 : i64} {
  func.func @patch_embed_kernel(%arg0: i32, %arg1: memref<1x16x64xf32, #tpu.memory_space<vmem>>, %arg2: memref<64x32xbf16, #tpu.memory_space<vmem>>, %arg3: memref<1x32xf32, #tpu.memory_space<vmem>>, %arg4: memref<16x32xf32, #tpu.memory_space<vmem>>, %arg5: memref<1x32xf32, #tpu.memory_space<vmem>>, %arg6: memref<1x17x32xf32, #tpu.memory_space<vmem>>) attributes {dimension_semantics = [#tpu.dimension_semantics<parallel>], iteration_bounds = array<i64: 2>, scalar_prefetch = 0 : i64, scratch_operands = 0 : i64, tpu.core_type = #tpu.core_type<tc>, window_params = [{transform_indices = @transform_0, window_bounds = array<i64: 1, 16, 64>}, {pipeline_mode = #tpu.pipeline_mode<synchronous>, transform_indices = @transform_1, window_bounds = array<i64: 64, 32>}, {pipeline_mode = #tpu.pipeline_mode<synchronous>, transform_indices = @transform_2, window_bounds = array<i64: 1, 32>}, {pipeline_mode = #tpu.pipeline_mode<synchronous>, transform_indices = @transform_3, window_bounds = array<i64: 16, 32>}, {pipeline_mode = #tpu.pipeline_mode<synchronous>, transform_indices = @transform_4, window_bounds = array<i64: 1, 32>}, {transform_indices = @transform_5, window_bounds = array<i64: 1, 17, 32>}]} {
    %c0 = arith.constant 0 : index
    %c0_0 = arith.constant 0 : index
    %c0_1 = arith.constant 0 : index
    %0 = vector.load %arg1[%c0, %c0_0, %c0_1] : memref<1x16x64xf32, #tpu.memory_space<vmem>>, vector<1x16x64xf32>
    %1 = vector.shape_cast %0 : vector<1x16x64xf32> to vector<16x64xf32>
    %2 = arith.truncf %1 : vector<16x64xf32> to vector<16x64xbf16>
    %c0_2 = arith.constant 0 : index
    %c0_3 = arith.constant 0 : index
    %3 = vector.load %arg2[%c0_2, %c0_3] : memref<64x32xbf16, #tpu.memory_space<vmem>>, vector<64x32xbf16>
    %cst = arith.constant dense<0.000000e+00> : vector<16x32xf32>
    %4 = tpu.matmul %2, %3, %cst {dimension_numbers = #tpu.dot_dimension_numbers<[1], [0], [0], [1], [0, 0, 1, 1], [], []>} : vector<16x64xbf16>, vector<64x32xbf16>, vector<16x32xf32> -> vector<16x32xf32>
    %c0_4 = arith.constant 0 : index
    %c0_5 = arith.constant 0 : index
    %5 = vector.load %arg3[%c0_4, %c0_5] : memref<1x32xf32, #tpu.memory_space<vmem>>, vector<1x32xf32>
    %6 = vector.broadcast %5 : vector<1x32xf32> to vector<16x32xf32>
    %7 = arith.addf %4, %6 : vector<16x32xf32>
    %c0_6 = arith.constant 0 : index
    %c0_7 = arith.constant 0 : index
    %8 = vector.load %arg4[%c0_6, %c0_7] : memref<16x32xf32, #tpu.memory_space<vmem>>, vector<16x32xf32>
    %9 = arith.addf %7, %8 : vector<16x32xf32>
    %c0_8 = arith.constant 0 : index
    %c0_9 = arith.constant 0 : index
    %10 = vector.load %arg5[%c0_8, %c0_9] : memref<1x32xf32, #tpu.memory_space<vmem>>, vector<1x32xf32>
    %c0_10 = arith.constant 0 : index
    %c0_11 = arith.constant 0 : index
    %c0_12 = arith.constant 0 : index
    %11 = vector.load %arg6[%c0_10, %c0_11, %c0_12] : memref<1x17x32xf32, #tpu.memory_space<vmem>>, vector<1x1x32xf32>
    %12 = vector.shape_cast %11 : vector<1x1x32xf32> to vector<1x32xf32>
    %13 = vector.shape_cast %10 : vector<1x32xf32> to vector<1x1x32xf32>
    tpu.vector_store %arg6[%c0_10, %c0_11, %c0_12], %13 {strides = array<i32>} : memref<1x17x32xf32, #tpu.memory_space<vmem>>, vector<1x1x32xf32>,
    %c0_13 = arith.constant 0 : index
    %c1 = arith.constant 1 : index
    %c0_14 = arith.constant 0 : index
    %14 = vector.load %arg6[%c0_13, %c1, %c0_14] : memref<1x17x32xf32, #tpu.memory_space<vmem>>, vector<1x16x32xf32>
    %15 = vector.shape_cast %14 : vector<1x16x32xf32> to vector<16x32xf32>
    %16 = vector.shape_cast %9 : vector<16x32xf32> to vector<1x16x32xf32>
    tpu.vector_store %arg6[%c0_13, %c1, %c0_14], %16 {strides = array<i32>} : memref<1x17x32xf32, #tpu.memory_space<vmem>>, vector<1x16x32xf32>,
    return
  }
  func.func @transform_0(%arg0: i32) -> (i32, i32, i32) {
    %c0_i32 = arith.constant 0 : i32
    %c0_i32_0 = arith.constant 0 : i32
    %c0_i32_1 = arith.constant 0 : i32
    return %arg0, %c0_i32, %c0_i32_0 : i32, i32, i32
  }
  func.func @transform_1(%arg0: i32) -> (i32, i32) {
    %c0_i32 = arith.constant 0 : i32
    %c0_i32_0 = arith.constant 0 : i32
    %c0_i32_1 = arith.constant 0 : i32
    return %c0_i32, %c0_i32_0 : i32, i32
  }
  func.func @transform_2(%arg0: i32) -> (i32, i32) {
    %c0_i32 = arith.constant 0 : i32
    %c0_i32_0 = arith.constant 0 : i32
    %c0_i32_1 = arith.constant 0 : i32
    return %c0_i32, %c0_i32_0 : i32, i32
  }
  func.func @transform_3(%arg0: i32) -> (i32, i32) {
    %c0_i32 = arith.constant 0 : i32
    %c0_i32_0 = arith.constant 0 : i32
    %c0_i32_1 = arith.constant 0 : i32
    return %c0_i32, %c0_i32_0 : i32, i32
  }
  func.func @transform_4(%arg0: i32) -> (i32, i32) {
    %c0_i32 = arith.constant 0 : i32
    %c0_i32_0 = arith.constant 0 : i32
    %c0_i32_1 = arith.constant 0 : i32
    return %c0_i32, %c0_i32_0 : i32, i32
  }
  func.func @transform_5(%arg0: i32) -> (i32, i32, i32) {
    %c0_i32 = arith.constant 0 : i32
    %c0_i32_0 = arith.constant 0 : i32
    %c0_i32_1 = arith.constant 0 : i32
    return %arg0, %c0_i32, %c0_i32_0 : i32, i32, i32
  }
}

</mosaic_0001>

<llo_original>
// kernel: tpu_custom_call.1
$region0: #{tpu_custom_call.1}
  #allocation0 [shape = 'u32[]', space=smem, size = 0x4, offset = 0x4, fixed_abs, tag = 'smem constant byte address 0x4 - core index']
  #allocation1 [shape = 'u32[72,128]{1,0:T(1,128)}', space=vmem, size = 0x9000, scoped, tag = 'internal scratch']
  %s0 = inlined_call_operand.vmem [shape: f32[2,16,64], index: 0, kind: input, shape index: {}]
  %s1 = inlined_call_operand.vmem [shape: bf16[64,32], index: 1, kind: input, shape index: {}]
  %s2 = inlined_call_operand.vmem [shape: f32[1,32], index: 2, kind: input, shape index: {}]
  %s3 = inlined_call_operand.vmem [shape: f32[16,32], index: 3, kind: input, shape index: {}]
  %s4 = inlined_call_operand.vmem [shape: f32[1,32], index: 4, kind: input, shape index: {}]
  %s5 = inlined_call_operand.vmem [shape: f32[2,17,32], index: 5, kind: output, shape index: {}]
  %s6 = sld [smem:[#allocation0]]
  $region53: #{tpu_custom_call.1} parent=0
    _
  %s8 = ssub.s32 1, %s6
  %s9 = scalar_select 0, %s8, %s6
  loop: start=0, step=1, limit=4
  $region2: #{tpu_custom_call.1} parent=0 // loop_pre_header
    _
  $region3: #{tpu_custom_call.1} parent=0 // loop_header
    %s11 = sphi 0, %s15
    %p12 = scmp.ge.s32.totalorder %s11, 4
    %s21 = sphi 0, %s23
    %s24 = sphi 0, %s21
    %s25 = sphi 0, %s24
    %s41 = sphi 0, %s25
    %s45 = sphi 0, %s45
    %s47 = sphi 0, %s45
    %s48 = sphi 0, %s47
    %s62 = sphi 0, %s48
    %s66 = sphi 0, %s66
    %s68 = sphi 0, %s66
    %s69 = sphi 0, %s68
    %s83 = sphi 0, %s69
    %s87 = sphi 0, %s87
    %s89 = sphi 0, %s87
    %s90 = sphi 0, %s89
    %s104 = sphi 0, %s90
    %s108 = sphi 0, %s108
    %s110 = sphi 0, %s108
    %s111 = sphi 0, %s110
    %s125 = sphi 0, %s111
    %s131 = sphi 0, %s133
    %s134 = sphi 0, %s131
    %s135 = sphi 0, %s134
    %s151 = sphi 0, %s135
  $region4: #{tpu_custom_call.1} parent=0 // loop_header_branch
    %14 = sbr.rel (%p12) target = $region8
  $region5: #{tpu_custom_call.1} parent=0 // loop_body
    %s16 = ssub.s32 %s11, 1
    %s17 = ssub.s32 %s11, 2
    %s18 = sadd.s32 %s11, 1
    %s19 = ssub.s32 %s11, %s18
    %p20 = scmp.eq.s32.totalorder %s19, 0
    %s22 = sadd.s32 %s21, 1
    %s23 = scalar_select %p20, %s21, %s22
    %p26 = pneg %p20
    %p27 = scmp.eq.s32.totalorder %s11, 1
    %p28 = por %p26, %p27
    %p29 = scmp.ne.s32.totalorder %s21, %s24
    %p30 = scmp.eq.s32.totalorder %s11, 0
    %p31 = por %p29, %p30
    %p32 = scmp.ne.s32.totalorder %s21, %s24
    %p33 = scmp.eq.s32.totalorder %s16, 1
    %p34 = por %p32, %p33
    %p35 = scmp.ne.s32.totalorder %s24, %s25
    %p36 = scmp.eq.s32.totalorder %s16, 0
    %p37 = por %p35, %p36
    %p38 = scmp.ne.s32.totalorder %s24, %s25
    %p39 = scmp.eq.s32.totalorder %s17, 1
    %p40 = por %p38, %p39
    %p42 = scmp.ne.s32.totalorder %s25, %s41
    %p43 = scmp.eq.s32.totalorder %s17, 0
    %p44 = por %p42, %p43
    %s46 = sadd.s32 %s45, 1
    %p49 = scmp.eq.s32.totalorder %s11, 1
    %p50 = scmp.ne.s32.totalorder %s45, %s47
    %p51 = scmp.eq.s32.totalorder %s11, 0
    %p52 = por %p50, %p51
    %p53 = scmp.ne.s32.totalorder %s45, %s47
    %p54 = scmp.eq.s32.totalorder %s16, 1
    %p55 = por %p53, %p54
    %p56 = scmp.ne.s32.totalorder %s47, %s48
    %p57 = scmp.eq.s32.totalorder %s16, 0
    %p58 = por %p56, %p57
    %p59 = scmp.ne.s32.totalorder %s47, %s48
    %p60 = scmp.eq.s32.totalorder %s17, 1
    %p61 = por %p59, %p60
    %p63 = scmp.ne.s32.totalorder %s48, %s62
    %p64 = scmp.eq.s32.totalorder %s17, 0
    %p65 = por %p63, %p64
    %s67 = sadd.s32 %s66, 1
    %p70 = scmp.eq.s32.totalorder %s11, 1
    %p71 = scmp.ne.s32.totalorder %s66, %s68
    %p72 = scmp.eq.s32.totalorder %s11, 0
    %p73 = por %p71, %p72
    %p74 = scmp.ne.s32.totalorder %s66, %s68
    %p75 = scmp.eq.s32.totalorder %s16, 1
    %p76 = por %p74, %p75
    %p77 = scmp.ne.s32.totalorder %s68, %s69
    %p78 = scmp.eq.s32.totalorder %s16, 0
    %p79 = por %p77, %p78
    %p80 = scmp.ne.s32.totalorder %s68, %s69
    %p81 = scmp.eq.s32.totalorder %s17, 1
    %p82 = por %p80, %p81
    %p84 = scmp.ne.s32.totalorder %s69, %s83
    %p85 = scmp.eq.s32.totalorder %s17, 0
    %p86 = por %p84, %p85
    %s88 = sadd.s32 %s87, 1
    %p91 = scmp.eq.s32.totalorder %s11, 1
    %p92 = scmp.ne.s32.totalorder %s87, %s89
    %p93 = scmp.eq.s32.totalorder %s11, 0
    %p94 = por %p92, %p93
    %p95 = scmp.ne.s32.totalorder %s87, %s89
    %p96 = scmp.eq.s32.totalorder %s16, 1
    %p97 = por %p95, %p96
    %p98 = scmp.ne.s32.totalorder %s89, %s90
    %p99 = scmp.eq.s32.totalorder %s16, 0
    %p100 = por %p98, %p99
    %p101 = scmp.ne.s32.totalorder %s89, %s90
    %p102 = scmp.eq.s32.totalorder %s17, 1
    %p103 = por %p101, %p102
    %p105 = scmp.ne.s32.totalorder %s90, %s104
    %p106 = scmp.eq.s32.totalorder %s17, 0
    %p107 = por %p105, %p106
    %s109 = sadd.s32 %s108, 1
    %p112 = scmp.eq.s32.totalorder %s11, 1
    %p113 = scmp.ne.s32.totalorder %s108, %s110
    %p114 = scmp.eq.s32.totalorder %s11, 0
    %p115 = por %p113, %p114
    %p116 = scmp.ne.s32.totalorder %s108, %s110
    %p117 = scmp.eq.s32.totalorder %s16, 1
    %p118 = por %p116, %p117
    %p119 = scmp.ne.s32.totalorder %s110, %s111
    %p120 = scmp.eq.s32.totalorder %s16, 0
    %p121 = por %p119, %p120
    %p122 = scmp.ne.s32.totalorder %s110, %s111
    %p123 = scmp.eq.s32.totalorder %s17, 1
    %p124 = por %p122, %p123
    %p126 = scmp.ne.s32.totalorder %s111, %s125
    %p127 = scmp.eq.s32.totalorder %s17, 0
    %p128 = por %p126, %p127
    %s129 = ssub.s32 %s11, %s18
    %p130 = scmp.eq.s32.totalorder %s129, 0
    %s132 = sadd.s32 %s131, 1
    %s133 = scalar_select %p130, %s131, %s132
    %p136 = pneg %p130
    %p137 = scmp.eq.s32.totalorder %s11, 1
    %p138 = por %p136, %p137
    %p139 = scmp.ne.s32.totalorder %s131, %s134
    %p140 = scmp.eq.s32.totalorder %s11, 0
    %p141 = por %p139, %p140
    %p142 = scmp.ne.s32.totalorder %s131, %s134
    %p143 = scmp.eq.s32.totalorder %s16, 1
    %p144 = por %p142, %p143
    %p145 = scmp.ne.s32.totalorder %s134, %s135
    %p146 = scmp.eq.s32.totalorder %s16, 0
    %p147 = por %p145, %p146
    %p148 = scmp.ne.s32.totalorder %s134, %s135
    %p149 = scmp.eq.s32.totalorder %s17, 1
    %p150 = por %p148, %p149
    %p152 = scmp.ne.s32.totalorder %s135, %s151
    %p153 = scmp.eq.s32.totalorder %s17, 0
    %p154 = por %p152, %p153
    %p155 = scmp.le.s32.totalorder 1, %s11
    %p156 = scmp.lt.s32.totalorder %s11, 3
    %p157 = pnand %p155, %p156
    %p158 = pneg %p157
    // Predicated region
    $region9: #{tpu_custom_call.1} parent=5 // pred_check
      _
    $region10: #{tpu_custom_call.1} parent=5 // pred_check_branch
      %160 = sbr.rel (%p157) target = $region12
    $region11: #{tpu_custom_call.1} parent=5 // pred_region
      %s161 = ssub.s32 %s11, 1
      // Predicated region
      $region13: #{tpu_custom_call.1} parent=11 // pred_check
        %p162 = pneg %p58
      $region14: #{tpu_custom_call.1} parent=11 // pred_check_branch
        %164 = sbr.rel (%p162) target = $region16
      $region15: #{tpu_custom_call.1} parent=11 // pred_region
        _
      $region16: #{tpu_custom_call.1} parent=11 // pred_fallthru
        _
      // Predicated region
      $region17: #{tpu_custom_call.1} parent=11 // pred_check
        %p165 = pneg %p79
      $region18: #{tpu_custom_call.1} parent=11 // pred_check_branch
        %167 = sbr.rel (%p165) target = $region20
      $region19: #{tpu_custom_call.1} parent=11 // pred_region
        _
      $region20: #{tpu_custom_call.1} parent=11 // pred_fallthru
        _
      // Predicated region
      $region21: #{tpu_custom_call.1} parent=11 // pred_check
        %p168 = pneg %p100
      $region22: #{tpu_custom_call.1} parent=11 // pred_check_branch
        %170 = sbr.rel (%p168) target = $region24
      $region23: #{tpu_custom_call.1} parent=11 // pred_region
        _
      $region24: #{tpu_custom_call.1} parent=11 // pred_fallthru
        _
      // Predicated region
      $region25: #{tpu_custom_call.1} parent=11 // pred_check
        %p171 = pneg %p121
      $region26: #{tpu_custom_call.1} parent=11 // pred_check_branch
        %173 = sbr.rel (%p171) target = $region28
      $region27: #{tpu_custom_call.1} parent=11 // pred_region
        _
      $region28: #{tpu_custom_call.1} parent=11 // pred_fallthru
        _
    $region12: #{tpu_custom_call.1} parent=5 // pred_fallthru
      _
    %p174 = scmp.lt.s32.totalorder %s11, 2
    // Predicated region
    $region29: #{tpu_custom_call.1} parent=5 // pred_check
      %p175 = pneg %p174
    $region30: #{tpu_custom_call.1} parent=5 // pred_check_branch
      %177 = sbr.rel (%p175) target = $region32
    $region31: #{tpu_custom_call.1} parent=5 // pred_region
      // Predicated region
      $region33: #{tpu_custom_call.1} parent=31 // pred_check
        %p178 = pneg %p31
      $region34: #{tpu_custom_call.1} parent=31 // pred_check_branch
        %180 = sbr.rel (%p178) target = $region36
      $region35: #{tpu_custom_call.1} parent=31 // pred_region
        %p181 = scmp.lt.s32.totalorder %s11, 1
        %s182 = scalar_select %p181, %s11, 1
        %s183 = smul.addr %s182, 2
        %s184 = smul.addr %s183, 8
        %s185 = scalar_lea.vmem %s0, %s184
      $region36: #{tpu_custom_call.1} parent=31 // pred_fallthru
        _
    $region32: #{tpu_custom_call.1} parent=5 // pred_fallthru
      _
    %p186 = scmp.le.s32.totalorder 1, %s11
    %p187 = scmp.lt.s32.totalorder %s11, 3
    %p188 = pnand %p186, %p187
    %p189 = pneg %p188
    // Predicated region
    $region37: #{tpu_custom_call.1} parent=5 // pred_check
      _
    $region38: #{tpu_custom_call.1} parent=5 // pred_check_branch
      %191 = sbr.rel (%p188) target = $region40
    $region39: #{tpu_custom_call.1} parent=5 // pred_region
      %s192 = ssub.s32 %s11, 1
      %p193 = scmp.lt.s32.totalorder %s16, 1
      %s194 = scalar_select %p193, %s16, 1
      %s195 = smul.addr %s194, 2
      %s196 = smul.addr %s195, 8
      %s197 = scalar_lea.vmem %s0, %s196
      %p198 = pneg %p37
      %p199 = pneg %p34
      %p200 = pneg %p58
      %p201 = pneg %p55
      %p202 = pneg %p79
      %p203 = pneg %p76
      %p204 = pneg %p100
      %p205 = pneg %p97
      %p206 = pneg %p121
      %p207 = pneg %p118
      %p208 = pneg %p147
      %p209 = pneg %p144
      %p210 = scmp.lt.s32.totalorder %s16, 1
      %s211 = scalar_select %p210, %s16, 1
      %s212 = smul.addr %s211, 3
      %s213 = smul.addr %s212, 8
      %s214 = scalar_lea.vmem %s5, %s213
      %p215 = scmp.lt.s32.totalorder %s16, 1
      %s216 = scalar_select %p215, %s16, 1
      %s217 = smul.addr %s216, 2
      %s218 = smul.addr %s217, 8
      %s219 = scalar_lea.vmem %s0, %s218
      %p220 = scmp.lt.s32.totalorder %s16, 1
      %s221 = scalar_select %p220, %s16, 1
      %s222 = smul.addr %s221, 3
      %s223 = smul.addr %s222, 8
      %s224 = scalar_lea.vmem %s5, %s223
      %v226 = vld [vmem:[%s219] sm:$0xff]
      %v227 = vld [vmem:[%s219 + $0x8] sm:$0xff]
      %v228 = vpack.c.bf16 %v227, %v226
      %v229 = vld [vmem:[%s1] sm:$0xf]
      %v230 = vld [vmem:[%s1 + $0x4] sm:$0xf]
      %v231 = vld [vmem:[%s1 + $0x8] sm:$0xf]
      %v232 = vld [vmem:[%s1 + $0xc] sm:$0xf]
      %v233 = vld [vmem:[%s1 + $0x10] sm:$0xf]
      %v234 = vld [vmem:[%s1 + $0x14] sm:$0xf]
      %v235 = vld [vmem:[%s1 + $0x18] sm:$0xf]
      %v236 = vld [vmem:[%s1 + $0x1c] sm:$0xf]
      %v237 = vld [vmem:[%s2] sm:$0x1]
      %v239 = vperm.slane %v237, 0
      %v249 = vunpack.c.l.b16 %v229
      %v250 = vunpack.c.l.b16 %v230
      %v251 = vunpack.c.l.b16 %v231
      %v252 = vunpack.c.l.b16 %v232
      %v253 = vunpack.c.l.b16 %v233
      %v254 = vunpack.c.l.b16 %v234
      %v255 = vunpack.c.l.b16 %v235
      %v256 = vunpack.c.l.b16 %v236
      %v257 = vpack.c.b16 %v250, %v249
      %v258 = vpack.c.b16 %v252, %v251
      %v259 = vpack.c.b16 %v254, %v253
      %v260 = vpack.c.b16 %v256, %v255
      %vm265 = vcmask 523264
      %v267 = vsel %vm265, %v228, 0
      %269 = vmatpush.bf16.msra.mxu0 0
      %270 = vmatpush.bf16.msra.mxu0 0
      %271 = vmatpush.bf16.msra.mxu0 0
      %272 = vmatpush.bf16.msra.mxu0 0
      %273 = vmatpush.bf16.msra.mxu0 %v260
      %274 = vmatpush.bf16.msra.mxu0 %v259
      %275 = vmatpush.bf16.msra.mxu0 %v258
      %276 = vmatpush.bf16.msra.mxu0 %v257
      %277 = vmatmul.bf16.gmra.mxu0 %v267
      %v278 = vpop.f32.mrf.mxu0
      %v279 = vadd.f32 %v239, %v278
      %v280 = vpop.f32.mrf.mxu0
      %v281 = vadd.f32 %v239, %v280
      %282 = vdwg.mxu0
      %v283 = vld [vmem:[%s3] sm:$0xff]
      %v284 = vld [vmem:[%s3 + $0x8] sm:$0xff]
      %v285 = vadd.f32 %v279, %v283
      %v286 = vadd.f32 %v281, %v284
      %v287 = vld [vmem:[%s4] sm:$0x1]
      %vm288 = vcmask 253952
      %289 = vst.msk [vmem:[%s224] sm:$0x1] %vm288, %v287
      %vm290 = vcmask 261120
      %291 = vst.msk [vmem:[%s224 + $0x1] sm:$0xff] %vm290, %v285
      %292 = vst.msk [vmem:[%s224 + $0x9] sm:$0xff] %vm290, %v286
      %p293 = scmp.lt.s32.totalorder %s16, 1
      %s294 = scalar_select %p293, %s16, 1
      %s295 = smul.addr %s294, 3
      %s296 = smul.addr %s295, 8
      %s297 = scalar_lea.vmem %s5, %s296
      // Predicated region
      $region41: #{tpu_custom_call.1} parent=39 // pred_check
        %p298 = pneg %p144
      $region42: #{tpu_custom_call.1} parent=39 // pred_check_branch
        %300 = sbr.rel (%p298) target = $region44
      $region43: #{tpu_custom_call.1} parent=39 // pred_region
        _
      $region44: #{tpu_custom_call.1} parent=39 // pred_fallthru
        _
    $region40: #{tpu_custom_call.1} parent=5 // pred_fallthru
      _
    %p301 = scmp.le.s32.totalorder 2, %s11
    // Predicated region
    $region45: #{tpu_custom_call.1} parent=5 // pred_check
      %p302 = pneg %p301
    $region46: #{tpu_custom_call.1} parent=5 // pred_check_branch
      %304 = sbr.rel (%p302) target = $region48
    $region47: #{tpu_custom_call.1} parent=5 // pred_region
      %s305 = ssub.s32 %s11, 2
      // Predicated region
      $region49: #{tpu_custom_call.1} parent=47 // pred_check
        %p306 = pneg %p150
      $region50: #{tpu_custom_call.1} parent=47 // pred_check_branch
        %308 = sbr.rel (%p306) target = $region52
      $region51: #{tpu_custom_call.1} parent=47 // pred_region
        %p309 = scmp.lt.s32.totalorder %s17, 1
        %s310 = scalar_select %p309, %s17, 1
        %s311 = smul.addr %s310, 3
        %s312 = smul.addr %s311, 8
        %s313 = scalar_lea.vmem %s5, %s312
      $region52: #{tpu_custom_call.1} parent=47 // pred_fallthru
        _
    $region48: #{tpu_custom_call.1} parent=5 // pred_fallthru
      _
  $region6: #{tpu_custom_call.1} parent=0 // loop_footer
    %s15 = sadd.s32 1, %s11
  $region7: #{tpu_custom_call.1} parent=0 // loop_footer_branch
    %10 = sbr.rel target = $region3
  $region8: #{tpu_custom_call.1} parent=0 // loop_exit
    _

</llo_original>
